<compile_context>
chip_gen: v7x
topology: tpu7x:2x2x1
jax: 0.10.0
libtpu: 0.0.40
codegen_flags: <defaults>
</compile_context>

<pallas_src>
import functools
import math

import jax
import jax.numpy as jnp
from jax.experimental import pallas as pl
from jax.experimental.pallas import tpu as pltpu

# ---------------- config (mirrors the PyTorch config dict) ----------------
CONFIG = {
    "emb_dim": 32,
    "context_length": 8,
    "n_heads": 4,
    "drop_rate": 0.0,      # dropout is identity in eval / p=0.0
    "qkv_bias": True,
    "activation": "gelu",  # tanh-approx GELU (GPT-style); see note below
}
BATCH = 2
EPS = 1e-5
# dtype-aware "minus infinity" for masking; scores are always held in f32.
NEG_MASK = 0.5 * float(jnp.finfo(jnp.float32).min)


def _gelu_tanh(x):
    # NOTE: GPT-style tanh-approx GELU. If the original FeedForward used
    # nn.GELU() (erf), swap this for jax.scipy.special.erf-based GELU.
    return 0.5 * x * (1.0 + jnp.tanh(jnp.sqrt(2.0 / jnp.pi) * (x + 0.044715 * x ** 3)))


def _layernorm_fast(v, gamma, beta):
    # one-pass variance + rsqrt: shortest serial VPU/XLU/EUP chain
    mean = jnp.mean(v, axis=-1, keepdims=True)
    mean2 = jnp.mean(v * v, axis=-1, keepdims=True)
    var = mean2 - mean * mean                      # unbiased=False
    return gamma * ((v - mean) * jax.lax.rsqrt(var + EPS)) + beta


# ------------------------------- kernel -----------------------------------
def transformer_block_kernel(x_ref, wqkv_ref, wo_ref, wfc_ref, wpr_ref,
                             pv_ref, hmask_ref, bias_ref, o_ref, *, H):
    x = x_ref[...]                       # (R, D) f32; R rows = one or more sequences
    R, D = x.shape

    # packed small params: one (8, 4D) slab (single VMEM tile / one DMA)
    pv = pv_ref[...]
    g1, b1 = pv[0:1, :D], pv[1:2, :D]
    g2, b2 = pv[2:3, :D], pv[3:4, :D]
    bo, bpr = pv[4:5, :D], pv[5:6, :D]
    bfc = pv[6:7, :]                     # (1, 4D)
    bqkv = pv[7:8, :3 * D]               # (1, 3D)

    head_mask = hmask_ref[...]           # (H*R, D) f32 {0,1}, precomputed host-side
    attn_bias = bias_ref[...]            # (H*R, R) f32 {0, NEG_MASK}, precomputed

    # ----- LN1 + fused QKV projection (attention scale folded into Wq/bq) -----
    h = _layernorm_fast(x, g1, b1)
    qkv = jnp.dot(h.astype(jnp.bfloat16), wqkv_ref[...],
                  preferred_element_type=jnp.float32) + bqkv
    q = qkv[:, 0:D]
    k = qkv[:, D:2 * D]
    v = qkv[:, 2 * D:3 * D]

    # ----- all heads in one shot: stack head-masked Q copies along sublanes -----
    # row (h*R + r) of `qs` corresponds to head h, query r
    qs = jnp.concatenate([q] * H, axis=0) * head_mask            # (H*R, D)

    # scores[h*R + r, c] = q_h[r] . k_h[c]   -- one MXU push for all heads
    scores = jax.lax.dot_general(
        qs.astype(jnp.bfloat16), k.astype(jnp.bfloat16),
        (((1,), (1,)), ((), ())), preferred_element_type=jnp.float32)   # (H*R, R)

    # causal + same-sequence mask, additive, precomputed
    scores = scores + attn_bias

    scores = scores - jnp.max(scores, axis=-1, keepdims=True)
    p = jnp.exp(scores)
    # exact reciprocal (not approx): keeps the tolerance budget for bf16 MXU operands
    p = p * pl.reciprocal(jnp.sum(p, axis=-1, keepdims=True), approx=False)

    ctx_s = jnp.dot(p.astype(jnp.bfloat16), v.astype(jnp.bfloat16),
                    preferred_element_type=jnp.float32)           # (H*R, D)
    ctx_s = ctx_s * head_mask
    # recover (R, D) context: each head keeps only its hd-wide column block, so a
    # tree-sum of the H sublane groups is exact (2 dependent VPU add levels).
    parts = [ctx_s[i * R:(i + 1) * R] for i in range(H)]
    while len(parts) > 1:
        nxt = [parts[i] + parts[i + 1] for i in range(0, len(parts) - 1, 2)]
        if len(parts) % 2:
            nxt.append(parts[-1])
        parts = nxt
    ctx = parts[0]

    x1 = x + jnp.dot(ctx.astype(jnp.bfloat16), wo_ref[...],
                     preferred_element_type=jnp.float32) + bo

    # ----- LN2 + feed-forward (D -> 4D -> D, GELU) -----
    h2 = _layernorm_fast(x1, g2, b2)
    ff = jnp.dot(h2.astype(jnp.bfloat16), wfc_ref[...],
                 preferred_element_type=jnp.float32) + bfc
    ff = _gelu_tanh(ff)
    out = x1 + jnp.dot(ff.astype(jnp.bfloat16), wpr_ref[...],
                       preferred_element_type=jnp.float32) + bpr
    o_ref[...] = out.astype(o_ref.dtype)

    # TODO(synk): dropout (drop_rate=0.0 / eval mode) is the identity; no in-kernel RNG dropout.


# --------------------- one-time parameter preparation -----------------------
def _build_masks(R, T, H, D):
    """Head-selection mask (H*R, D) and causal+segment additive bias (H*R, R)."""
    hd = D // H
    hr = jnp.arange(H * R)
    r = hr % R                      # flat (batch, time) row index within the block
    h = hr // R                     # head index
    c = jnp.arange(R)
    valid = ((r[:, None] // T) == (c[None, :] // T)) & \
            ((c[None, :] % T) <= (r[:, None] % T))
    attn_bias = jnp.where(valid, 0.0, NEG_MASK).astype(jnp.float32)
    d = jnp.arange(D)
    head_mask = ((d[None, :] // hd) == h[:, None]).astype(jnp.float32)
    return head_mask, attn_bias


def prepare_params(params, *, batch=BATCH, seq=None, batch_parallel=False):
    """Hoist ALL packing out of the per-call path (done once, reused every call)."""
    D = params["wq"].shape[0]
    Dff = params["w_fc"].shape[1]
    H = CONFIG["n_heads"]
    hd = D // H
    T = CONFIG["context_length"] if seq is None else seq
    scale = 1.0 / math.sqrt(hd)

    # fused QKV weight with the attention scale folded into the Q half
    wqkv = jnp.concatenate(
        [params["wq"] * scale, params["wk"], params["wv"]], axis=1)      # (D, 3D)
    bqkv = jnp.concatenate(
        [params["bq"] * scale, params["bk"], params["bv"]], axis=1)      # (1, 3D)

    # pack every small (1, *) parameter into a single (8, 4D) f32 slab
    pv = jnp.zeros((8, Dff), jnp.float32)
    pv = pv.at[0, :D].set(params["ln1_g"][0])
    pv = pv.at[1, :D].set(params["ln1_b"][0])
    pv = pv.at[2, :D].set(params["ln2_g"][0])
    pv = pv.at[3, :D].set(params["ln2_b"][0])
    pv = pv.at[4, :D].set(params["bo"][0])
    pv = pv.at[5, :D].set(params["b_proj"][0])
    pv = pv.at[6, :Dff].set(params["b_fc"][0])
    pv = pv.at[7, :3 * D].set(bqkv[0])

    nblk = batch if batch_parallel else 1
    R = (batch * T) // nblk
    head_mask, attn_bias = _build_masks(R, T, H, D)

    prep = {
        # bf16 weights for the MXU (f32 accumulation in-kernel)
        "wqkv": wqkv.astype(jnp.bfloat16),
        "wo": params["wo"].astype(jnp.bfloat16),
        "wfc": params["w_fc"].astype(jnp.bfloat16),
        "wproj": params["w_proj"].astype(jnp.bfloat16),
        # f32 elementwise params + masks
        "pv": pv,
        "head_mask": head_mask,
        "attn_bias": attn_bias,
        # static metadata
        "T": T, "H": H, "nblk": nblk,
    }
    # materialize now so nothing is left on the per-call path
    for key, val in prep.items():
        if isinstance(val, jax.Array):
            prep[key] = jax.block_until_ready(val)
    return prep


# ------------------------------ per-call path --------------------------------
@functools.partial(jax.jit, static_argnames=("H", "nblk"))
def _block_apply(x, wqkv, wo, wfc, wproj, pv, head_mask, attn_bias, *, H, nblk):
    B, T, D = x.shape
    Dff = wfc.shape[1]
    BT = B * T
    R = BT // nblk

    x2 = x.reshape(BT, D)
    kernel = functools.partial(transformer_block_kernel, H=H)
    const = lambda b: (0, 0)

    out2 = pl.pallas_call(
        kernel,
        out_shape=jax.ShapeDtypeStruct((BT, D), x.dtype),
        grid=(nblk,),
        in_specs=[
            pl.BlockSpec((R, D), lambda b: (b, 0)),        # activations
            # NOTE (v7x scaling): when D grows, cap weight buffering with
            # pipeline_mode=pl.Buffered(1) on these constant-index specs and
            # re-derive tiles against v7x's 64 MiB VMEM. Irrelevant at D=32.
            pl.BlockSpec((D, 3 * D), const),               # fused Wqkv (bf16)
            pl.BlockSpec((D, D), const),                   # Wo (bf16)
            pl.BlockSpec((D, Dff), const),                 # W_fc (bf16)
            pl.BlockSpec((Dff, D), const),                 # W_proj (bf16)
            pl.BlockSpec((8, Dff), const),                 # packed small params
            pl.BlockSpec((H * R, D), const),               # head-selection mask
            pl.BlockSpec((H * R, R), const),               # causal additive bias
        ],
        out_specs=pl.BlockSpec((R, D), lambda b: (b, 0)),
        compiler_params=pltpu.CompilerParams(dimension_semantics=("parallel",)),
    )(x2, wqkv, wo, wfc, wproj, pv, head_mask, attn_bias)
    return out2.reshape(B, T, D)


def transformer_block(x, prep):
    """Apply one transformer block. `prep` comes from prepare_params()."""
    B, T, _ = x.shape
    assert prep["attn_bias"].shape[1] == (B * T) // prep["nblk"], \
        "prepare_params() was built for a different (batch, seq, batch_parallel)"
    return _block_apply(x, prep["wqkv"], prep["wo"], prep["wfc"], prep["wproj"],
                        prep["pv"], prep["head_mask"], prep["attn_bias"],
                        H=prep["H"], nblk=prep["nblk"])


# -------------------------- pure-JAX reference ------------------------------
def _layernorm_ref(v, gamma, beta):
    mean = jnp.mean(v, axis=-1, keepdims=True)
    var = jnp.mean((v - mean) ** 2, axis=-1, keepdims=True)   # unbiased=False
    return gamma * ((v - mean) / jnp.sqrt(var + EPS)) + beta


def reference_block(x, params):
    B, T, D = x.shape
    H = CONFIG["n_heads"]
    hd = D // H

    h = _layernorm_ref(x, params["ln1_g"], params["ln1_b"])
    q = h @ params["wq"] + params["bq"]
    k = h @ params["wk"] + params["bk"]
    v = h @ params["wv"] + params["bv"]
    q = q.reshape(B, T, H, hd).transpose(0, 2, 1, 3)
    k = k.reshape(B, T, H, hd).transpose(0, 2, 1, 3)
    v = v.reshape(B, T, H, hd).transpose(0, 2, 1, 3)
    scores = jnp.einsum("bhtd,bhsd->bhts", q, k) / math.sqrt(hd)
    mask = jnp.tril(jnp.ones((T, T), dtype=bool))
    scores = jnp.where(mask[None, None], scores, -1e30)
    p = jax.nn.softmax(scores, axis=-1)
    ctx = jnp.einsum("bhts,bhsd->bhtd", p, v).transpose(0, 2, 1, 3).reshape(B, T, D)
    x1 = x + (ctx @ params["wo"] + params["bo"])

    h2 = _layernorm_ref(x1, params["ln2_g"], params["ln2_b"])
    ff = _gelu_tanh(h2 @ params["w_fc"] + params["b_fc"])
    return x1 + (ff @ params["w_proj"] + params["b_proj"])


# --------------------------------- main -------------------------------------
if __name__ == "__main__":
    D = CONFIG["emb_dim"]
    T = CONFIG["context_length"]
    Dff = 4 * D

    keys = jax.random.split(jax.random.PRNGKey(0), 13)

    def init_w(k, shape):
        return 0.02 * jax.random.normal(k, shape, dtype=jnp.float32)

    params = {
        "wq": init_w(keys[0], (D, D)),   "bq": init_w(keys[1], (1, D)),
        "wk": init_w(keys[2], (D, D)),   "bk": init_w(keys[3], (1, D)),
        "wv": init_w(keys[4], (D, D)),   "bv": init_w(keys[5], (1, D)),
        "wo": init_w(keys[6], (D, D)),   "bo": init_w(keys[7], (1, D)),
        "ln1_g": jnp.ones((1, D), jnp.float32),  "ln1_b": jnp.zeros((1, D), jnp.float32),
        "ln2_g": jnp.ones((1, D), jnp.float32),  "ln2_b": jnp.zeros((1, D), jnp.float32),
        "w_fc": init_w(keys[8], (D, Dff)),   "b_fc": init_w(keys[9], (1, Dff)),
        "w_proj": init_w(keys[10], (Dff, D)), "b_proj": init_w(keys[11], (1, D)),
    }

    x = jax.random.normal(keys[12], (BATCH, T, D), dtype=jnp.float32)

    ref = jax.block_until_ready(reference_block(x, params))

    # Default: collapsed grid (whole batch in one step) — recommended for this
    # size on all of v5e/v6e/v7x. All parameter packing done once, up front.
    prep = prepare_params(params, batch=BATCH)
    out = jax.block_until_ready(transformer_block(x, prep))

    # Optional: grid=(B,) "parallel" path (only worthwhile on v7x once each
    # core gets >= ~128-256 rows); run once here purely for correctness coverage.
    prep_mc = prepare_params(params, batch=BATCH, batch_parallel=True)
    out_mc = jax.block_until_ready(transformer_block(x, prep_mc))

    assert out.shape == (BATCH, T, D)
    # Tolerance reflects bf16 MXU operands (f32 accumulation) vs the f32 reference.
    assert jnp.allclose(out, ref, rtol=2e-3, atol=2e-3), "mismatch vs reference (collapsed grid)"
    assert jnp.allclose(out_mc, ref, rtol=2e-3, atol=2e-3), "mismatch vs reference (batch-parallel grid)"
    print("KERNEL_OK")
</pallas_src>

<mosaic_0001>
module attributes {stable_mosaic.version = 11 : i64} {
  func.func @transformer_block_kernel(%arg0: i32, %arg1: memref<16x32xf32, #tpu.memory_space<vmem>>, %arg2: memref<32x96xbf16, #tpu.memory_space<vmem>>, %arg3: memref<32x32xbf16, #tpu.memory_space<vmem>>, %arg4: memref<32x128xbf16, #tpu.memory_space<vmem>>, %arg5: memref<128x32xbf16, #tpu.memory_space<vmem>>, %arg6: memref<8x128xf32, #tpu.memory_space<vmem>>, %arg7: memref<64x32xf32, #tpu.memory_space<vmem>>, %arg8: memref<64x16xf32, #tpu.memory_space<vmem>>, %arg9: memref<16x32xf32, #tpu.memory_space<vmem>>) attributes {dimension_semantics = [#tpu.dimension_semantics<parallel>], iteration_bounds = array<i64: 1>, scalar_prefetch = 0 : i64, scratch_operands = 0 : i64, tpu.core_type = #tpu.core_type<tc>, window_params = [{transform_indices = @transform_0, window_bounds = array<i64: 16, 32>}, {pipeline_mode = #tpu.pipeline_mode<synchronous>, transform_indices = @transform_1, window_bounds = array<i64: 32, 96>}, {pipeline_mode = #tpu.pipeline_mode<synchronous>, transform_indices = @transform_2, window_bounds = array<i64: 32, 32>}, {pipeline_mode = #tpu.pipeline_mode<synchronous>, transform_indices = @transform_3, window_bounds = array<i64: 32, 128>}, {pipeline_mode = #tpu.pipeline_mode<synchronous>, transform_indices = @transform_4, window_bounds = array<i64: 128, 32>}, {pipeline_mode = #tpu.pipeline_mode<synchronous>, transform_indices = @transform_5, window_bounds = array<i64: 8, 128>}, {pipeline_mode = #tpu.pipeline_mode<synchronous>, transform_indices = @transform_6, window_bounds = array<i64: 64, 32>}, {pipeline_mode = #tpu.pipeline_mode<synchronous>, transform_indices = @transform_7, window_bounds = array<i64: 64, 16>}, {transform_indices = @transform_8, window_bounds = array<i64: 16, 32>}]} {
    %c0 = arith.constant 0 : index
    %c0_0 = arith.constant 0 : index
    %0 = vector.load %arg1[%c0, %c0_0] : memref<16x32xf32, #tpu.memory_space<vmem>>, vector<16x32xf32>
    %c0_1 = arith.constant 0 : index
    %c0_2 = arith.constant 0 : index
    %1 = vector.load %arg6[%c0_1, %c0_2] : memref<8x128xf32, #tpu.memory_space<vmem>>, vector<8x128xf32>
    %2 = vector.extract_strided_slice %1 {offsets = [0, 0], sizes = [1, 32], strides = [1, 1]} : vector<8x128xf32> to vector<1x32xf32>
    %3 = vector.extract_strided_slice %1 {offsets = [1, 0], sizes = [1, 32], strides = [1, 1]} : vector<8x128xf32> to vector<1x32xf32>
    %4 = vector.extract_strided_slice %1 {offsets = [2, 0], sizes = [1, 32], strides = [1, 1]} : vector<8x128xf32> to vector<1x32xf32>
    %5 = vector.extract_strided_slice %1 {offsets = [3, 0], sizes = [1, 32], strides = [1, 1]} : vector<8x128xf32> to vector<1x32xf32>
    %6 = vector.extract_strided_slice %1 {offsets = [4, 0], sizes = [1, 32], strides = [1, 1]} : vector<8x128xf32> to vector<1x32xf32>
    %7 = vector.extract_strided_slice %1 {offsets = [5, 0], sizes = [1, 32], strides = [1, 1]} : vector<8x128xf32> to vector<1x32xf32>
    %8 = vector.extract_strided_slice %1 {offsets = [6, 0], sizes = [1, 128], strides = [1, 1]} : vector<8x128xf32> to vector<1x128xf32>
    %9 = vector.extract_strided_slice %1 {offsets = [7, 0], sizes = [1, 96], strides = [1, 1]} : vector<8x128xf32> to vector<1x96xf32>
    %c0_3 = arith.constant 0 : index
    %c0_4 = arith.constant 0 : index
    %10 = vector.load %arg7[%c0_3, %c0_4] : memref<64x32xf32, #tpu.memory_space<vmem>>, vector<64x32xf32>
    %c0_5 = arith.constant 0 : index
    %c0_6 = arith.constant 0 : index
    %11 = vector.load %arg8[%c0_5, %c0_6] : memref<64x16xf32, #tpu.memory_space<vmem>>, vector<64x16xf32>
    %cst = arith.constant dense<0.000000e+00> : vector<16xf32>
    %12 = vector.multi_reduction <add>, %0, %cst [1] : vector<16x32xf32> to vector<16xf32>
    %13 = vector.shape_cast %12 : vector<16xf32> to vector<16x1xf32>
    %cst_7 = arith.constant 3.200000e+01 : f32
    %14 = vector.broadcast %cst_7 : f32 to vector<16x1xf32>
    %15 = arith.divf %13, %14 : vector<16x1xf32>
    %16 = arith.mulf %0, %0 : vector<16x32xf32>
    %cst_8 = arith.constant dense<0.000000e+00> : vector<16xf32>
    %17 = vector.multi_reduction <add>, %16, %cst_8 [1] : vector<16x32xf32> to vector<16xf32>
    %18 = vector.shape_cast %17 : vector<16xf32> to vector<16x1xf32>
    %cst_9 = arith.constant 3.200000e+01 : f32
    %19 = vector.broadcast %cst_9 : f32 to vector<16x1xf32>
    %20 = arith.divf %18, %19 : vector<16x1xf32>
    %21 = arith.mulf %15, %15 : vector<16x1xf32>
    %22 = arith.subf %20, %21 : vector<16x1xf32>
    %23 = vector.broadcast %15 : vector<16x1xf32> to vector<16x32xf32>
    %24 = arith.subf %0, %23 : vector<16x32xf32>
    %cst_10 = arith.constant 9.99999974E-6 : f32
    %25 = vector.broadcast %cst_10 : f32 to vector<16x1xf32>
    %26 = arith.addf %22, %25 : vector<16x1xf32>
    %27 = math.rsqrt %26 : vector<16x1xf32>
    %28 = vector.broadcast %27 : vector<16x1xf32> to vector<16x32xf32>
    %29 = arith.mulf %24, %28 : vector<16x32xf32>
    %30 = vector.broadcast %2 : vector<1x32xf32> to vector<16x32xf32>
    %31 = arith.mulf %30, %29 : vector<16x32xf32>
    %32 = vector.broadcast %3 : vector<1x32xf32> to vector<16x32xf32>
    %33 = arith.addf %31, %32 : vector<16x32xf32>
    %34 = arith.truncf %33 : vector<16x32xf32> to vector<16x32xbf16>
    %c0_11 = arith.constant 0 : index
    %c0_12 = arith.constant 0 : index
    %35 = vector.load %arg2[%c0_11, %c0_12] : memref<32x96xbf16, #tpu.memory_space<vmem>>, vector<32x96xbf16>
    %cst_13 = arith.constant dense<0.000000e+00> : vector<16x96xf32>
    %36 = tpu.matmul %34, %35, %cst_13 {dimension_numbers = #tpu.dot_dimension_numbers<[1], [0], [0], [1], [0, 0, 1, 1], [], []>} : vector<16x32xbf16>, vector<32x96xbf16>, vector<16x96xf32> -> vector<16x96xf32>
    %37 = vector.broadcast %9 : vector<1x96xf32> to vector<16x96xf32>
    %38 = arith.addf %36, %37 : vector<16x96xf32>
    %39 = vector.extract_strided_slice %38 {offsets = [0, 0], sizes = [16, 32], strides = [1, 1]} : vector<16x96xf32> to vector<16x32xf32>
    %40 = vector.extract_strided_slice %38 {offsets = [0, 32], sizes = [16, 32], strides = [1, 1]} : vector<16x96xf32> to vector<16x32xf32>
    %41 = vector.extract_strided_slice %38 {offsets = [0, 64], sizes = [16, 32], strides = [1, 1]} : vector<16x96xf32> to vector<16x32xf32>
    %42 = tpu.concatenate %39, %39, %39, %39 in 0 : vector<16x32xf32>, vector<16x32xf32>, vector<16x32xf32>, vector<16x32xf32> -> vector<64x32xf32>
    %43 = arith.mulf %42, %10 : vector<64x32xf32>
    %44 = arith.truncf %43 : vector<64x32xf32> to vector<64x32xbf16>
    %45 = arith.truncf %40 : vector<16x32xf32> to vector<16x32xbf16>
    %cst_14 = arith.constant dense<0.000000e+00> : vector<64x16xf32>
    %46 = tpu.matmul %44, %45, %cst_14 {dimension_numbers = #tpu.dot_dimension_numbers<[1], [1], [0], [0], [0, 0, 1, 0], [], []>} : vector<64x32xbf16>, vector<16x32xbf16>, vector<64x16xf32> -> vector<64x16xf32>
    %47 = arith.addf %46, %11 : vector<64x16xf32>
    %cst_15 = arith.constant dense<0xFF800000> : vector<64xf32>
    %48 = vector.multi_reduction <maximumf>, %47, %cst_15 [1] : vector<64x16xf32> to vector<64xf32>
    %49 = vector.shape_cast %48 : vector<64xf32> to vector<64x1xf32>
    %50 = vector.broadcast %49 : vector<64x1xf32> to vector<64x16xf32>
    %51 = arith.subf %47, %50 : vector<64x16xf32>
    %52 = math.exp %51 : vector<64x16xf32>
    %cst_16 = arith.constant dense<0.000000e+00> : vector<64xf32>
    %53 = vector.multi_reduction <add>, %52, %cst_16 [1] : vector<64x16xf32> to vector<64xf32>
    %54 = vector.shape_cast %53 : vector<64xf32> to vector<64x1xf32>
    %55 = tpu.reciprocal %54 : vector<64x1xf32> -> vector<64x1xf32>
    %56 = vector.broadcast %55 : vector<64x1xf32> to vector<64x16xf32>
    %57 = arith.mulf %52, %56 : vector<64x16xf32>
    %58 = arith.truncf %57 : vector<64x16xf32> to vector<64x16xbf16>
    %59 = arith.truncf %41 : vector<16x32xf32> to vector<16x32xbf16>
    %cst_17 = arith.constant dense<0.000000e+00> : vector<64x32xf32>
    %60 = tpu.matmul %58, %59, %cst_17 {dimension_numbers = #tpu.dot_dimension_numbers<[1], [0], [0], [1], [0, 0, 1, 1], [], []>} : vector<64x16xbf16>, vector<16x32xbf16>, vector<64x32xf32> -> vector<64x32xf32>
    %61 = arith.mulf %60, %10 : vector<64x32xf32>
    %62 = vector.extract_strided_slice %61 {offsets = [0, 0], sizes = [16, 32], strides = [1, 1]} : vector<64x32xf32> to vector<16x32xf32>
    %63 = vector.extract_strided_slice %61 {offsets = [16, 0], sizes = [16, 32], strides = [1, 1]} : vector<64x32xf32> to vector<16x32xf32>
    %64 = vector.extract_strided_slice %61 {offsets = [32, 0], sizes = [16, 32], strides = [1, 1]} : vector<64x32xf32> to vector<16x32xf32>
    %65 = vector.extract_strided_slice %61 {offsets = [48, 0], sizes = [16, 32], strides = [1, 1]} : vector<64x32xf32> to vector<16x32xf32>
    %66 = arith.addf %62, %63 : vector<16x32xf32>
    %67 = arith.addf %64, %65 : vector<16x32xf32>
    %68 = arith.addf %66, %67 : vector<16x32xf32>
    %69 = arith.truncf %68 : vector<16x32xf32> to vector<16x32xbf16>
    %c0_18 = arith.constant 0 : index
    %c0_19 = arith.constant 0 : index
    %70 = vector.load %arg3[%c0_18, %c0_19] : memref<32x32xbf16, #tpu.memory_space<vmem>>, vector<32x32xbf16>
    %cst_20 = arith.constant dense<0.000000e+00> : vector<16x32xf32>
    %71 = tpu.matmul %69, %70, %cst_20 {dimension_numbers = #tpu.dot_dimension_numbers<[1], [0], [0], [1], [0, 0, 1, 1], [], []>} : vector<16x32xbf16>, vector<32x32xbf16>, vector<16x32xf32> -> vector<16x32xf32>
    %72 = arith.addf %0, %71 : vector<16x32xf32>
    %73 = vector.broadcast %6 : vector<1x32xf32> to vector<16x32xf32>
    %74 = arith.addf %72, %73 : vector<16x32xf32>
    %cst_21 = arith.constant dense<0.000000e+00> : vector<16xf32>
    %75 = vector.multi_reduction <add>, %74, %cst_21 [1] : vector<16x32xf32> to vector<16xf32>
    %76 = vector.shape_cast %75 : vector<16xf32> to vector<16x1xf32>
    %cst_22 = arith.constant 3.200000e+01 : f32
    %77 = vector.broadcast %cst_22 : f32 to vector<16x1xf32>
    %78 = arith.divf %76, %77 : vector<16x1xf32>
    %79 = arith.mulf %74, %74 : vector<16x32xf32>
    %cst_23 = arith.constant dense<0.000000e+00> : vector<16xf32>
    %80 = vector.multi_reduction <add>, %79, %cst_23 [1] : vector<16x32xf32> to vector<16xf32>
    %81 = vector.shape_cast %80 : vector<16xf32> to vector<16x1xf32>
    %cst_24 = arith.constant 3.200000e+01 : f32
    %82 = vector.broadcast %cst_24 : f32 to vector<16x1xf32>
    %83 = arith.divf %81, %82 : vector<16x1xf32>
    %84 = arith.mulf %78, %78 : vector<16x1xf32>
    %85 = arith.subf %83, %84 : vector<16x1xf32>
    %86 = vector.broadcast %78 : vector<16x1xf32> to vector<16x32xf32>
    %87 = arith.subf %74, %86 : vector<16x32xf32>
    %cst_25 = arith.constant 9.99999974E-6 : f32
    %88 = vector.broadcast %cst_25 : f32 to vector<16x1xf32>
    %89 = arith.addf %85, %88 : vector<16x1xf32>
    %90 = math.rsqrt %89 : vector<16x1xf32>
    %91 = vector.broadcast %90 : vector<16x1xf32> to vector<16x32xf32>
    %92 = arith.mulf %87, %91 : vector<16x32xf32>
    %93 = vector.broadcast %4 : vector<1x32xf32> to vector<16x32xf32>
    %94 = arith.mulf %93, %92 : vector<16x32xf32>
    %95 = vector.broadcast %5 : vector<1x32xf32> to vector<16x32xf32>
    %96 = arith.addf %94, %95 : vector<16x32xf32>
    %97 = arith.truncf %96 : vector<16x32xf32> to vector<16x32xbf16>
    %c0_26 = arith.constant 0 : index
    %c0_27 = arith.constant 0 : index
    %98 = vector.load %arg4[%c0_26, %c0_27] : memref<32x128xbf16, #tpu.memory_space<vmem>>, vector<32x128xbf16>
    %cst_28 = arith.constant dense<0.000000e+00> : vector<16x128xf32>
    %99 = tpu.matmul %97, %98, %cst_28 {dimension_numbers = #tpu.dot_dimension_numbers<[1], [0], [0], [1], [0, 0, 1, 1], [], []>} : vector<16x32xbf16>, vector<32x128xbf16>, vector<16x128xf32> -> vector<16x128xf32>
    %100 = vector.broadcast %8 : vector<1x128xf32> to vector<16x128xf32>
    %101 = arith.addf %99, %100 : vector<16x128xf32>
    %cst_29 = arith.constant 5.000000e-01 : f32
    %102 = vector.broadcast %cst_29 : f32 to vector<16x128xf32>
    %103 = arith.mulf %102, %101 : vector<16x128xf32>
    %cst_30 = arith.constant 0.636619746 : f32
    %104 = math.sqrt %cst_30 : f32
    %105 = arith.mulf %101, %101 : vector<16x128xf32>
    %106 = arith.mulf %101, %105 : vector<16x128xf32>
    %cst_31 = arith.constant 4.471500e-02 : f32
    %107 = vector.broadcast %cst_31 : f32 to vector<16x128xf32>
    %108 = arith.mulf %107, %106 : vector<16x128xf32>
    %109 = arith.addf %101, %108 : vector<16x128xf32>
    %110 = vector.broadcast %104 : f32 to vector<16x128xf32>
    %111 = arith.mulf %110, %109 : vector<16x128xf32>
    %112 = math.tanh %111 : vector<16x128xf32>
    %cst_32 = arith.constant 1.000000e+00 : f32
    %113 = vector.broadcast %cst_32 : f32 to vector<16x128xf32>
    %114 = arith.addf %113, %112 : vector<16x128xf32>
    %115 = arith.mulf %103, %114 : vector<16x128xf32>
    %116 = arith.truncf %115 : vector<16x128xf32> to vector<16x128xbf16>
    %c0_33 = arith.constant 0 : index
    %c0_34 = arith.constant 0 : index
    %117 = vector.load %arg5[%c0_33, %c0_34] : memref<128x32xbf16, #tpu.memory_space<vmem>>, vector<128x32xbf16>
    %cst_35 = arith.constant dense<0.000000e+00> : vector<16x32xf32>
    %118 = tpu.matmul %116, %117, %cst_35 {dimension_numbers = #tpu.dot_dimension_numbers<[1], [0], [0], [1], [0, 0, 1, 1], [], []>} : vector<16x128xbf16>, vector<128x32xbf16>, vector<16x32xf32> -> vector<16x32xf32>
    %119 = arith.addf %74, %118 : vector<16x32xf32>
    %120 = vector.broadcast %7 : vector<1x32xf32> to vector<16x32xf32>
    %121 = arith.addf %119, %120 : vector<16x32xf32>
    %c0_36 = arith.constant 0 : index
    %c0_37 = arith.constant 0 : index
    %122 = vector.load %arg9[%c0_36, %c0_37] : memref<16x32xf32, #tpu.memory_space<vmem>>, vector<16x32xf32>
    tpu.vector_store %arg9[%c0_36, %c0_37], %121 {strides = array<i32>} : memref<16x32xf32, #tpu.memory_space<vmem>>, vector<16x32xf32>,
    return
  }
  func.func @transform_0(%arg0: i32) -> (i32, i32) {
    %c0_i32 = arith.constant 0 : i32
    %c0_i32_0 = arith.constant 0 : i32
    return %arg0, %c0_i32 : i32, i32
  }
  func.func @transform_1(%arg0: i32) -> (i32, i32) {
    %c0_i32 = arith.constant 0 : i32
    %c0_i32_0 = arith.constant 0 : i32
    %c0_i32_1 = arith.constant 0 : i32
    return %c0_i32, %c0_i32_0 : i32, i32
  }
  func.func @transform_2(%arg0: i32) -> (i32, i32) {
    %c0_i32 = arith.constant 0 : i32
    %c0_i32_0 = arith.constant 0 : i32
    %c0_i32_1 = arith.constant 0 : i32
    return %c0_i32, %c0_i32_0 : i32, i32
  }
  func.func @transform_3(%arg0: i32) -> (i32, i32) {
    %c0_i32 = arith.constant 0 : i32
    %c0_i32_0 = arith.constant 0 : i32
    %c0_i32_1 = arith.constant 0 : i32
    return %c0_i32, %c0_i32_0 : i32, i32
  }
  func.func @transform_4(%arg0: i32) -> (i32, i32) {
    %c0_i32 = arith.constant 0 : i32
    %c0_i32_0 = arith.constant 0 : i32
    %c0_i32_1 = arith.constant 0 : i32
    return %c0_i32, %c0_i32_0 : i32, i32
  }
  func.func @transform_5(%arg0: i32) -> (i32, i32) {
    %c0_i32 = arith.constant 0 : i32
    %c0_i32_0 = arith.constant 0 : i32
    %c0_i32_1 = arith.constant 0 : i32
    return %c0_i32, %c0_i32_0 : i32, i32
  }
  func.func @transform_6(%arg0: i32) -> (i32, i32) {
    %c0_i32 = arith.constant 0 : i32
    %c0_i32_0 = arith.constant 0 : i32
    %c0_i32_1 = arith.constant 0 : i32
    return %c0_i32, %c0_i32_0 : i32, i32
  }
  func.func @transform_7(%arg0: i32) -> (i32, i32) {
    %c0_i32 = arith.constant 0 : i32
    %c0_i32_0 = arith.constant 0 : i32
    %c0_i32_1 = arith.constant 0 : i32
    return %c0_i32, %c0_i32_0 : i32, i32
  }
  func.func @transform_8(%arg0: i32) -> (i32, i32) {
    %c0_i32 = arith.constant 0 : i32
    %c0_i32_0 = arith.constant 0 : i32
    return %arg0, %c0_i32 : i32, i32
  }
}

</mosaic_0001>

<llo_original>
// kernel: _block_apply.1
$region0: #{_block_apply.1}
  #allocation0 [shape = 'u32[]', space=smem, size = 0x4, offset = 0x4, fixed_abs, tag = 'smem constant byte address 0x4 - core index']
  #allocation1 [shape = 'u32[144,128]{1,0:T(1,128)}', space=vmem, size = 0x12000, scoped, tag = 'internal scratch']
  %s0 = inlined_call_operand.vmem [shape: f32[16,32], index: 0, kind: input, shape index: {}]
  %s1 = inlined_call_operand.vmem [shape: bf16[32,96], index: 1, kind: input, shape index: {}]
  %s2 = inlined_call_operand.vmem [shape: bf16[32,32], index: 2, kind: input, shape index: {}]
  %s3 = inlined_call_operand.vmem [shape: bf16[32,128], index: 3, kind: input, shape index: {}]
  %s4 = inlined_call_operand.vmem [shape: bf16[128,32], index: 4, kind: input, shape index: {}]
  %s5 = inlined_call_operand.vmem [shape: f32[8,128], index: 5, kind: input, shape index: {}]
  %s6 = inlined_call_operand.vmem [shape: f32[64,32], index: 6, kind: input, shape index: {}]
  %s7 = inlined_call_operand.vmem [shape: f32[64,16], index: 7, kind: input, shape index: {}]
  %s8 = inlined_call_operand.hbm [shape: f32[16,32], index: 8, kind: output, shape index: {}]
  %s9 = sld [smem:[#allocation0]]
  $region42: #{_block_apply.1} parent=0
    _
  %s11 = ssub.s32 1, %s9
  %s12 = scalar_select 0, %s11, %s9
  $region1: #{_block_apply.1} parent=0
    #allocation2 [shape = 'u8[8192]{0}', space=vmem, size = 0x2000, scoped, tag = 'output window, operand 0, single buffered']
    #allocation3 [shape = 's32[1]{0}', space=sflag, size = 0x4, scoped, tag = 'scoped memory for _block_apply.1']
    %13 = vsyncpa [#allocation3], 0
    // Predicated region
    $region2: #{_block_apply.1} parent=1 // pred_check
      _
    $region3: #{_block_apply.1} parent=1 // pred_check_branch
      %15 = sbr.rel (0) target = $region5
    $region4: #{_block_apply.1} parent=1 // pred_region
      _
    $region5: #{_block_apply.1} parent=1 // pred_fallthru
      _
    // Predicated region
    $region6: #{_block_apply.1} parent=1 // pred_check
      _
    $region7: #{_block_apply.1} parent=1 // pred_check_branch
      %17 = sbr.rel (0) target = $region9
    $region8: #{_block_apply.1} parent=1 // pred_region
      _
    $region9: #{_block_apply.1} parent=1 // pred_fallthru
      _
    // Predicated region
    $region10: #{_block_apply.1} parent=1 // pred_check
      _
    $region11: #{_block_apply.1} parent=1 // pred_check_branch
      %19 = sbr.rel (0) target = $region13
    $region12: #{_block_apply.1} parent=1 // pred_region
      _
    $region13: #{_block_apply.1} parent=1 // pred_fallthru
      _
    // Predicated region
    $region14: #{_block_apply.1} parent=1 // pred_check
      _
    $region15: #{_block_apply.1} parent=1 // pred_check_branch
      %21 = sbr.rel (0) target = $region17
    $region16: #{_block_apply.1} parent=1 // pred_region
      _
    $region17: #{_block_apply.1} parent=1 // pred_fallthru
      _
    // Predicated region
    $region18: #{_block_apply.1} parent=1 // pred_check
      _
    $region19: #{_block_apply.1} parent=1 // pred_check_branch
      %23 = sbr.rel (0) target = $region21
    $region20: #{_block_apply.1} parent=1 // pred_region
      _
    $region21: #{_block_apply.1} parent=1 // pred_fallthru
      _
    // Predicated region
    $region22: #{_block_apply.1} parent=1 // pred_check
      _
    $region23: #{_block_apply.1} parent=1 // pred_check_branch
      %25 = sbr.rel (0) target = $region25
    $region24: #{_block_apply.1} parent=1 // pred_region
      _
    $region25: #{_block_apply.1} parent=1 // pred_fallthru
      _
    // Predicated region
    $region26: #{_block_apply.1} parent=1 // pred_check
      _
    $region27: #{_block_apply.1} parent=1 // pred_check_branch
      %27 = sbr.rel (0) target = $region29
    $region28: #{_block_apply.1} parent=1 // pred_region
      _
    $region29: #{_block_apply.1} parent=1 // pred_fallthru
      _
    // Predicated region
    $region30: #{_block_apply.1} parent=1 // pred_check
      _
    $region31: #{_block_apply.1} parent=1 // pred_check_branch
      %29 = sbr.rel (0) target = $region33
    $region32: #{_block_apply.1} parent=1 // pred_region
      _
    $region33: #{_block_apply.1} parent=1 // pred_fallthru
      _
    %v31 = vld [vmem:[%s0] sm:$0xff]
    %v32 = vld [vmem:[%s0 + $0x8] sm:$0xff]
    %v33 = vld [vmem:[%s5] sm:$0xff]
    %v34 = vld [vmem:[%s6] sm:$0xff]
    %v35 = vld [vmem:[%s6 + $0x8] sm:$0xff]
    %v36 = vld [vmem:[%s6 + $0x10] sm:$0xff]
    %v37 = vld [vmem:[%s6 + $0x18] sm:$0xff]
    %v38 = vld [vmem:[%s6 + $0x20] sm:$0xff]
    %v39 = vld [vmem:[%s6 + $0x28] sm:$0xff]
    %v40 = vld [vmem:[%s6 + $0x30] sm:$0xff]
    %v41 = vld [vmem:[%s6 + $0x38] sm:$0xff]
    %v42 = vld [vmem:[%s7] sm:$0xff]
    %v43 = vld [vmem:[%s7 + $0x8] sm:$0xff]
    %v44 = vld [vmem:[%s7 + $0x10] sm:$0xff]
    %v45 = vld [vmem:[%s7 + $0x18] sm:$0xff]
    %v46 = vld [vmem:[%s7 + $0x20] sm:$0xff]
    %v47 = vld [vmem:[%s7 + $0x28] sm:$0xff]
    %v48 = vld [vmem:[%s7 + $0x30] sm:$0xff]
    %v49 = vld [vmem:[%s7 + $0x38] sm:$0xff]
    %vm50 = vcmask 261120
    %v51 = vsel %vm50, %v31, 0.0
    %52 = vadd.xlane.f32.xlu0 %v51
    %v53 = vpop.xlane.xlu0 %52
    %v54 = vsel %vm50, %v32, 0.0
    %55 = vadd.xlane.f32.xlu0 %v54
    %v56 = vpop.xlane.xlu0 %55
    %v57 = vrcp.pop 32.0
    %v58 = vmul.f32 %v53, %v57
    %v59 = vmul.f32 %v56, %v57
    %v60 = vmul.f32 %v31, %v31
    %v61 = vmul.f32 %v32, %v32
    %v62 = vsel %vm50, %v60, 0.0
    %63 = vadd.xlane.f32.xlu0 %v62
    %v64 = vpop.xlane.xlu0 %63
    %v65 = vsel %vm50, %v61, 0.0
    %66 = vadd.xlane.f32.xlu0 %v65
    %v67 = vpop.xlane.xlu0 %66
    %v68 = vmul.f32 %v64, %v57
    %v69 = vmul.f32 %v67, %v57
    %v70 = vmul.f32 %v58, %v58
    %v71 = vmul.f32 %v59, %v59
    %v72 = vsub.f32 %v68, %v70
    %v73 = vsub.f32 %v69, %v71
    %v74 = vsub.f32 %v31, %v58
    %v75 = vsub.f32 %v32, %v59
    %v76 = vadd.f32 %v72, 1e-05
    %v77 = vadd.f32 %v73, 1e-05
    %v78 = vrsqrt.pop %v76
    %v79 = vrsqrt.pop %v77
    %v80 = vmul.f32 %v74, %v78
    %v81 = vmul.f32 %v75, %v79
    %v82 = vlaneseq
    %v83 = vshrl.u32 %v82, 7
    %v84 = vsub.s32 0, %v83
    %v85 = vrot.slane %v33, %v84
    %v86 = vmul.f32 %v85, %v80
    %v87 = vmul.f32 %v85, %v81
    %v88 = vlaneseq
    %v89 = vshrl.u32 %v88, 7
    %v90 = vsub.s32 1, %v89
    %v91 = vrot.slane %v33, %v90
    %v92 = vadd.f32 %v86, %v91
    %v93 = vadd.f32 %v87, %v91
    %v94 = vpack.c.bf16 %v93, %v92
    %v95 = vld [vmem:[%s1] sm:$0xf]
    %v96 = vld [vmem:[%s1 + $0x4] sm:$0xf]
    %v97 = vld [vmem:[%s1 + $0x8] sm:$0xf]
    %v98 = vld [vmem:[%s1 + $0xc] sm:$0xf]
    %v99 = vlaneseq
    %v100 = vshrl.u32 %v99, 7
    %v101 = vsub.s32 7, %v100
    %v102 = vrot.slane %v33, %v101
    %v107 = vunpack.c.l.b16 %v95
    %v108 = vunpack.c.l.b16 %v96
    %v109 = vunpack.c.l.b16 %v97
    %v110 = vunpack.c.l.b16 %v98
    %v111 = vpack.c.b16 %v108, %v107
    %v112 = vpack.c.b16 %v110, %v109
    %v116 = vsel %vm50, %v94, 0
    %118 = vmatprep.subr.bf16.mxu0 0
    %119 = vmatpush1.bf16.msra.mxu0 %v111
    %120 = vmatprep.subr.bf16.mxu0 0
    %121 = vmatpush1.bf16.msra.mxu0 %v112
    %122 = vmatprep.subr.bf16.mxu0 0
    %123 = vmatpush1.bf16.msra.mxu0 0
    %124 = vmatprep.subr.bf16.mxu0 0
    %125 = vmatpush1.bf16.msra.mxu0 0
    %126 = vmatprep.subr.bf16.mxu0 0
    %127 = vmatpush1.bf16.msra.mxu0 0
    %128 = vmatprep.subr.bf16.mxu0 0
    %129 = vmatpush1.bf16.msra.mxu0 0
    %130 = vmatprep.subr.bf16.mxu0 0
    %131 = vmatpush1.bf16.msra.mxu0 0
    %132 = vmatprep.subr.bf16.mxu0 0
    %133 = vmatpush1.bf16.msra.mxu0 0
    %134 = vmatprep.subr.bf16.mxu0 0
    %135 = vmatpush1.bf16.msra.mxu0 0
    %136 = vmatprep.subr.bf16.mxu0 0
    %137 = vmatpush1.bf16.msra.mxu0 0
    %138 = vmatprep.subr.bf16.mxu0 0
    %139 = vmatpush1.bf16.msra.mxu0 0
    %140 = vmatprep.subr.bf16.mxu0 0
    %141 = vmatpush1.bf16.msra.mxu0 0
    %142 = vmatprep.subr.bf16.mxu0 0
    %143 = vmatpush1.bf16.msra.mxu0 0
    %144 = vmatprep.subr.bf16.mxu0 0
    %145 = vmatpush1.bf16.msra.mxu0 0
    %146 = vmatprep.subr.bf16.mxu0 0
    %147 = vmatpush1.bf16.msra.mxu0 0
    %148 = vmatprep.subr.bf16.mxu0 0
    %149 = vmatpush1.bf16.msra.mxu0 0
    %150 = vmatprep.mubr.bf16.mxu0 0
    %151 = vmatmul.mubr.bf16.gmra.mrb[0].mxu0 %v116
    %v152 = vpop.f32.mrb[0].mxu0
    %v153 = vadd.f32 %v102, %v152
    %v154 = vpop.f32.mrb[0].mxu0
    %v155 = vpop.f32.mrb[0].mxu0
    %v156 = vadd.f32 %v102, %v155
    %v157 = vpop.f32.mrb[0].mxu0
    %158 = vdwg.mxu0
    %v159 = vmul.f32 %v153, %v34
    %v160 = vmul.f32 %v156, %v35
    %v161 = vmul.f32 %v153, %v36
    %v162 = vmul.f32 %v156, %v37
    %v163 = vmul.f32 %v153, %v38
    %v164 = vmul.f32 %v156, %v39
    %v165 = vmul.f32 %v153, %v40
    %v166 = vmul.f32 %v156, %v41
    %v167 = vpack.c.bf16 %v160, %v159
    %v168 = vpack.c.bf16 %v162, %v161
    %v169 = vpack.c.bf16 %v164, %v163
    %v170 = vpack.c.bf16 %v166, %v165
    %v171 = vpack.c.bf16 %v156, %v153
    %173 = vrot.lane.b32.xlu0 %v171, 96
    %v174 = vpop.permute.xlu0 %173
    %v176 = vsel %vm50, %v167, 0
    %v179 = vsel %vm50, %v168, 0
    %v182 = vsel %vm50, %v169, 0
    %v185 = vsel %vm50, %v170, 0
    %v188 = vsel %vm50, %v174, 0
    %190 = vmatprep.subr.bf16.mxu0 0
    %191 = vmatpush1.bf16.xpose.msra.mxu0 %v188
    %192 = vmatprep.subr.bf16.mxu0 0
    %193 = vmatpush1.bf16.xpose.msra.mxu0 0
    %194 = vmatprep.subr.bf16.mxu0 0
    %195 = vmatpush1.bf16.xpose.msra.mxu0 0
    %196 = vmatprep.subr.bf16.mxu0 0
    %197 = vmatpush1.bf16.xpose.msra.mxu0 0
    %198 = vmatprep.subr.bf16.mxu0 0
    %199 = vmatpush1.bf16.xpose.msra.mxu0 0
    %200 = vmatprep.subr.bf16.mxu0 0
    %201 = vmatpush1.bf16.xpose.msra.mxu0 0
    %202 = vmatprep.subr.bf16.mxu0 0
    %203 = vmatpush1.bf16.xpose.msra.mxu0 0
    %204 = vmatprep.subr.bf16.mxu0 0
    %205 = vmatpush1.bf16.xpose.msra.mxu0 0
    %206 = vmatprep.subr.bf16.mxu0 0
    %207 = vmatpush1.bf16.xpose.msra.mxu0 0
    %208 = vmatprep.subr.bf16.mxu0 0
    %209 = vmatpush1.bf16.xpose.msra.mxu0 0
    %210 = vmatprep.subr.bf16.mxu0 0
    %211 = vmatpush1.bf16.xpose.msra.mxu0 0
    %212 = vmatprep.subr.bf16.mxu0 0
    %213 = vmatpush1.bf16.xpose.msra.mxu0 0
    %214 = vmatprep.subr.bf16.mxu0 0
    %215 = vmatpush1.bf16.xpose.msra.mxu0 0
    %216 = vmatprep.subr.bf16.mxu0 0
    %217 = vmatpush1.bf16.xpose.msra.mxu0 0
    %218 = vmatprep.subr.bf16.mxu0 0
    %219 = vmatpush1.bf16.xpose.msra.mxu0 0
    %220 = vmatprep.subr.bf16.mxu0 0
    %221 = vmatpush1.bf16.xpose.msra.mxu0 0
    %222 = vmatprep.mubr.bf16.mxu0 0
    %223 = vmatmul.mubr.bf16.gmra.mrb[0].mxu0 %v176
    %v224 = vpop.f32.mrb[0].mxu0
    %v225 = vadd.f32 %v42, %v224
    %v226 = vpop.f32.mrb[0].mxu0
    %v227 = vpop.f32.mrb[0].mxu0
    %v228 = vadd.f32 %v43, %v227
    %v229 = vpop.f32.mrb[0].mxu0
    %230 = vmatprep.mubr.bf16.mxu0 0
    %231 = vmatmul.mubr.bf16.gmra.mrb[0].mxu0 %v179
    %v232 = vpop.f32.mrb[0].mxu0
    %v233 = vadd.f32 %v44, %v232
    %v234 = vpop.f32.mrb[0].mxu0
    %v235 = vpop.f32.mrb[0].mxu0
    %v236 = vadd.f32 %v45, %v235
    %v237 = vpop.f32.mrb[0].mxu0
    %238 = vmatprep.mubr.bf16.mxu0 0
    %239 = vmatmul.mubr.bf16.gmra.mrb[0].mxu0 %v182
    %v240 = vpop.f32.mrb[0].mxu0
    %v241 = vadd.f32 %v46, %v240
    %v242 = vpop.f32.mrb[0].mxu0
    %v243 = vpop.f32.mrb[0].mxu0
    %v244 = vadd.f32 %v47, %v243
    %v245 = vpop.f32.mrb[0].mxu0
    %246 = vmatprep.mubr.bf16.mxu0 0
    %247 = vmatmul.mubr.bf16.gmra.mrb[0].mxu0 %v185
    %v248 = vpop.f32.mrb[0].mxu0
    %v249 = vadd.f32 %v48, %v248
    %v250 = vpop.f32.mrb[0].mxu0
    %v251 = vpop.f32.mrb[0].mxu0
    %v252 = vadd.f32 %v49, %v251
    %v253 = vpop.f32.mrb[0].mxu0
    %254 = vdwg.mxu0
    %vm255 = vcmask 130048
    %v256 = vsel %vm255, %v225, -inf
    %257 = vmax.xlane.f32.xlu0 %v256
    %v258 = vpop.xlane.xlu0 %257
    %v259 = vsel %vm255, %v228, -inf
    %260 = vmax.xlane.f32.xlu0 %v259
    %v261 = vpop.xlane.xlu0 %260
    %v262 = vsel %vm255, %v233, -inf
    %263 = vmax.xlane.f32.xlu0 %v262
    %v264 = vpop.xlane.xlu0 %263
    %v265 = vsel %vm255, %v236, -inf
    %266 = vmax.xlane.f32.xlu0 %v265
    %v267 = vpop.xlane.xlu0 %266
    %v268 = vsel %vm255, %v241, -inf
    %269 = vmax.xlane.f32.xlu0 %v268
    %v270 = vpop.xlane.xlu0 %269
    %v271 = vsel %vm255, %v244, -inf
    %272 = vmax.xlane.f32.xlu0 %v271
    %v273 = vpop.xlane.xlu0 %272
    %v274 = vsel %vm255, %v249, -inf
    %275 = vmax.xlane.f32.xlu0 %v274
    %v276 = vpop.xlane.xlu0 %275
    %v277 = vsel %vm255, %v252, -inf
    %278 = vmax.xlane.f32.xlu0 %v277
    %v279 = vpop.xlane.xlu0 %278
    %v280 = vsub.f32 %v225, %v258
    %v281 = vsub.f32 %v228, %v261
    %v282 = vsub.f32 %v233, %v264
    %v283 = vsub.f32 %v236, %v267
    %v284 = vsub.f32 %v241, %v270
    %v285 = vsub.f32 %v244, %v273
    %v286 = vsub.f32 %v249, %v276
    %v287 = vsub.f32 %v252, %v279
    %v288 = vmul.f32 %v280, 1.442695
    %v289 = vpow.pop %v288
    %v290 = vmul.f32 %v281, 1.442695
    %v291 = vpow.pop %v290
    %v292 = vmul.f32 %v282, 1.442695
    %v293 = vpow.pop %v292
    %v294 = vmul.f32 %v283, 1.442695
    %v295 = vpow.pop %v294
    %v296 = vmul.f32 %v284, 1.442695
    %v297 = vpow.pop %v296
    %v298 = vmul.f32 %v285, 1.442695
    %v299 = vpow.pop %v298
    %v300 = vmul.f32 %v286, 1.442695
    %v301 = vpow.pop %v300
    %v302 = vmul.f32 %v287, 1.442695
    %v303 = vpow.pop %v302
    %v304 = vsel %vm255, %v289, 0.0
    %305 = vadd.xlane.f32.xlu0 %v304
    %v306 = vpop.xlane.xlu0 %305
    %v307 = vsel %vm255, %v291, 0.0
    %308 = vadd.xlane.f32.xlu0 %v307
    %v309 = vpop.xlane.xlu0 %308
    %v310 = vsel %vm255, %v293, 0.0
    %311 = vadd.xlane.f32.xlu0 %v310
    %v312 = vpop.xlane.xlu0 %311
    %v313 = vsel %vm255, %v295, 0.0
    %314 = vadd.xlane.f32.xlu0 %v313
    %v315 = vpop.xlane.xlu0 %314
    %v316 = vsel %vm255, %v297, 0.0
    %317 = vadd.xlane.f32.xlu0 %v316
    %v318 = vpop.xlane.xlu0 %317
    %v319 = vsel %vm255, %v299, 0.0
    %320 = vadd.xlane.f32.xlu0 %v319
    %v321 = vpop.xlane.xlu0 %320
    %v322 = vsel %vm255, %v301, 0.0
    %323 = vadd.xlane.f32.xlu0 %v322
    %v324 = vpop.xlane.xlu0 %323
    %v325 = vsel %vm255, %v303, 0.0
    %326 = vadd.xlane.f32.xlu0 %v325
    %v327 = vpop.xlane.xlu0 %326
    %v328 = vrcp.pop %v306
    %v329 = vrcp.pop %v309
    %v330 = vrcp.pop %v312
    %v331 = vrcp.pop %v315
    %v332 = vrcp.pop %v318
    %v333 = vrcp.pop %v321
    %v334 = vrcp.pop %v324
    %v335 = vrcp.pop %v327
    %v336 = vmul.f32 %v289, %v328
    %v337 = vmul.f32 %v291, %v329
    %v338 = vmul.f32 %v293, %v330
    %v339 = vmul.f32 %v295, %v331
    %v340 = vmul.f32 %v297, %v332
    %v341 = vmul.f32 %v299, %v333
    %v342 = vmul.f32 %v301, %v334
    %v343 = vmul.f32 %v303, %v335
    %v344 = vpack.c.bf16 %v337, %v336
    %v345 = vpack.c.bf16 %v339, %v338
    %v346 = vpack.c.bf16 %v341, %v340
    %v347 = vpack.c.bf16 %v343, %v342
    %348 = vrot.lane.b32.xlu0 %v171, 64
    %v349 = vpop.permute.xlu0 %348
    %v352 = vsel %vm255, %v344, 0
    %v355 = vsel %vm255, %v345, 0
    %v358 = vsel %vm255, %v346, 0
    %v361 = vsel %vm255, %v347, 0
    %363 = vmatprep.subr.bf16.mxu0 0
    %364 = vmatpush1.bf16.msra.mxu0 %v349
    %365 = vmatprep.subr.bf16.mxu0 0
    %366 = vmatpush1.bf16.msra.mxu0 0
    %367 = vmatprep.subr.bf16.mxu0 0
    %368 = vmatpush1.bf16.msra.mxu0 0
    %369 = vmatprep.subr.bf16.mxu0 0
    %370 = vmatpush1.bf16.msra.mxu0 0
    %371 = vmatprep.subr.bf16.mxu0 0
    %372 = vmatpush1.bf16.msra.mxu0 0
    %373 = vmatprep.subr.bf16.mxu0 0
    %374 = vmatpush1.bf16.msra.mxu0 0
    %375 = vmatprep.subr.bf16.mxu0 0
    %376 = vmatpush1.bf16.msra.mxu0 0
    %377 = vmatprep.subr.bf16.mxu0 0
    %378 = vmatpush1.bf16.msra.mxu0 0
    %379 = vmatprep.subr.bf16.mxu0 0
    %380 = vmatpush1.bf16.msra.mxu0 0
    %381 = vmatprep.subr.bf16.mxu0 0
    %382 = vmatpush1.bf16.msra.mxu0 0
    %383 = vmatprep.subr.bf16.mxu0 0
    %384 = vmatpush1.bf16.msra.mxu0 0
    %385 = vmatprep.subr.bf16.mxu0 0
    %386 = vmatpush1.bf16.msra.mxu0 0
    %387 = vmatprep.subr.bf16.mxu0 0
    %388 = vmatpush1.bf16.msra.mxu0 0
    %389 = vmatprep.subr.bf16.mxu0 0
    %390 = vmatpush1.bf16.msra.mxu0 0
    %391 = vmatprep.subr.bf16.mxu0 0
    %392 = vmatpush1.bf16.msra.mxu0 0
    %393 = vmatprep.subr.bf16.mxu0 0
    %394 = vmatpush1.bf16.msra.mxu0 0
    %395 = vmatprep.mubr.bf16.mxu0 0
    %396 = vmatmul.mubr.bf16.gmra.mrb[0].mxu0 %v352
    %v397 = vpop.f32.mrb[0].mxu0
    %v398 = vadd.f32 0.0, %v397
    %v399 = vpop.f32.mrb[0].mxu0
    %v400 = vpop.f32.mrb[0].mxu0
    %v401 = vadd.f32 0.0, %v400
    %v402 = vpop.f32.mrb[0].mxu0
    %403 = vmatprep.mubr.bf16.mxu0 0
    %404 = vmatmul.mubr.bf16.gmra.mrb[0].mxu0 %v355
    %v405 = vpop.f32.mrb[0].mxu0
    %v406 = vadd.f32 0.0, %v405
    %v407 = vpop.f32.mrb[0].mxu0
    %v408 = vpop.f32.mrb[0].mxu0
    %v409 = vadd.f32 0.0, %v408
    %v410 = vpop.f32.mrb[0].mxu0
    %411 = vmatprep.mubr.bf16.mxu0 0
    %412 = vmatmul.mubr.bf16.gmra.mrb[0].mxu0 %v358
    %v413 = vpop.f32.mrb[0].mxu0
    %v414 = vadd.f32 0.0, %v413
    %v415 = vpop.f32.mrb[0].mxu0
    %v416 = vpop.f32.mrb[0].mxu0
    %v417 = vadd.f32 0.0, %v416
    %v418 = vpop.f32.mrb[0].mxu0
    %419 = vmatprep.mubr.bf16.mxu0 0
    %420 = vmatmul.mubr.bf16.gmra.mrb[0].mxu0 %v361
    %v421 = vpop.f32.mrb[0].mxu0
    %v422 = vadd.f32 0.0, %v421
    %v423 = vpop.f32.mrb[0].mxu0
    %v424 = vpop.f32.mrb[0].mxu0
    %v425 = vadd.f32 0.0, %v424
    %v426 = vpop.f32.mrb[0].mxu0
    %427 = vdwg.mxu0
    %v428 = vmul.f32 %v398, %v34
    %v429 = vmul.f32 %v401, %v35
    %v430 = vmul.f32 %v406, %v36
    %v431 = vmul.f32 %v409, %v37
    %v432 = vmul.f32 %v414, %v38
    %v433 = vmul.f32 %v417, %v39
    %v434 = vmul.f32 %v422, %v40
    %v435 = vmul.f32 %v425, %v41
    %v436 = vadd.f32 %v428, %v430
    %v437 = vadd.f32 %v429, %v431
    %v438 = vadd.f32 %v432, %v434
    %v439 = vadd.f32 %v433, %v435
    %v440 = vadd.f32 %v436, %v438
    %v441 = vadd.f32 %v437, %v439
    %v442 = vpack.c.bf16 %v441, %v440
    %v443 = vld [vmem:[%s2] sm:$0xf]
    %v444 = vld [vmem:[%s2 + $0x4] sm:$0xf]
    %v445 = vld [vmem:[%s2 + $0x8] sm:$0xf]
    %v446 = vld [vmem:[%s2 + $0xc] sm:$0xf]
    %v451 = vunpack.c.l.b16 %v443
    %v452 = vunpack.c.l.b16 %v444
    %v453 = vunpack.c.l.b16 %v445
    %v454 = vunpack.c.l.b16 %v446
    %v455 = vpack.c.b16 %v452, %v451
    %v456 = vpack.c.b16 %v454, %v453
    %v460 = vsel %vm50, %v442, 0
    %462 = vmatprep.subr.bf16.mxu0 0
    %463 = vmatpush1.bf16.msra.mxu0 %v455
    %464 = vmatprep.subr.bf16.mxu0 0
    %465 = vmatpush1.bf16.msra.mxu0 %v456
    %466 = vmatprep.subr.bf16.mxu0 0
    %467 = vmatpush1.bf16.msra.mxu0 0
    %468 = vmatprep.subr.bf16.mxu0 0
    %469 = vmatpush1.bf16.msra.mxu0 0
    %470 = vmatprep.subr.bf16.mxu0 0
    %471 = vmatpush1.bf16.msra.mxu0 0
    %472 = vmatprep.subr.bf16.mxu0 0
    %473 = vmatpush1.bf16.msra.mxu0 0
    %474 = vmatprep.subr.bf16.mxu0 0
    %475 = vmatpush1.bf16.msra.mxu0 0
    %476 = vmatprep.subr.bf16.mxu0 0
    %477 = vmatpush1.bf16.msra.mxu0 0
    %478 = vmatprep.subr.bf16.mxu0 0
    %479 = vmatpush1.bf16.msra.mxu0 0
    %480 = vmatprep.subr.bf16.mxu0 0
    %481 = vmatpush1.bf16.msra.mxu0 0
    %482 = vmatprep.subr.bf16.mxu0 0
    %483 = vmatpush1.bf16.msra.mxu0 0
    %484 = vmatprep.subr.bf16.mxu0 0
    %485 = vmatpush1.bf16.msra.mxu0 0
    %486 = vmatprep.subr.bf16.mxu0 0
    %487 = vmatpush1.bf16.msra.mxu0 0
    %488 = vmatprep.subr.bf16.mxu0 0
    %489 = vmatpush1.bf16.msra.mxu0 0
    %490 = vmatprep.subr.bf16.mxu0 0
    %491 = vmatpush1.bf16.msra.mxu0 0
    %492 = vmatprep.subr.bf16.mxu0 0
    %493 = vmatpush1.bf16.msra.mxu0 0
    %494 = vmatprep.mubr.bf16.mxu0 0
    %495 = vmatmul.mubr.bf16.gmra.mrb[0].mxu0 %v460
    %v496 = vpop.f32.mrb[0].mxu0
    %v497 = vadd.f32 0.0, %v496
    %v498 = vpop.f32.mrb[0].mxu0
    %v499 = vpop.f32.mrb[0].mxu0
    %v500 = vadd.f32 0.0, %v499
    %v501 = vpop.f32.mrb[0].mxu0
    %502 = vdwg.mxu0
    %v503 = vadd.f32 %v31, %v497
    %v504 = vadd.f32 %v32, %v500
    %v505 = vlaneseq
    %v506 = vshrl.u32 %v505, 7
    %v507 = vsub.s32 4, %v506
    %v508 = vrot.slane %v33, %v507
    %v509 = vadd.f32 %v503, %v508
    %v510 = vadd.f32 %v504, %v508
    %v511 = vsel %vm50, %v509, 0.0
    %512 = vadd.xlane.f32.xlu0 %v511
    %v513 = vpop.xlane.xlu0 %512
    %v514 = vsel %vm50, %v510, 0.0
    %515 = vadd.xlane.f32.xlu0 %v514
    %v516 = vpop.xlane.xlu0 %515
    %v517 = vmul.f32 %v513, %v57
    %v518 = vmul.f32 %v516, %v57
    %v519 = vmul.f32 %v509, %v509
    %v520 = vmul.f32 %v510, %v510
    %v521 = vsel %vm50, %v519, 0.0
    %522 = vadd.xlane.f32.xlu0 %v521
    %v523 = vpop.xlane.xlu0 %522
    %v524 = vsel %vm50, %v520, 0.0
    %525 = vadd.xlane.f32.xlu0 %v524
    %v526 = vpop.xlane.xlu0 %525
    %v527 = vmul.f32 %v523, %v57
    %v528 = vmul.f32 %v526, %v57
    %v529 = vmul.f32 %v517, %v517
    %v530 = vmul.f32 %v518, %v518
    %v531 = vsub.f32 %v527, %v529
    %v532 = vsub.f32 %v528, %v530
    %v533 = vsub.f32 %v509, %v517
    %v534 = vsub.f32 %v510, %v518
    %v535 = vadd.f32 %v531, 1e-05
    %v536 = vadd.f32 %v532, 1e-05
    %v537 = vrsqrt.pop %v535
    %v538 = vrsqrt.pop %v536
    %v539 = vmul.f32 %v533, %v537
    %v540 = vmul.f32 %v534, %v538
    %v541 = vlaneseq
    %v542 = vshrl.u32 %v541, 7
    %v543 = vsub.s32 2, %v542
    %v544 = vrot.slane %v33, %v543
    %v545 = vmul.f32 %v544, %v539
    %v546 = vmul.f32 %v544, %v540
    %v547 = vlaneseq
    %v548 = vshrl.u32 %v547, 7
    %v549 = vsub.s32 3, %v548
    %v550 = vrot.slane %v33, %v549
    %v551 = vadd.f32 %v545, %v550
    %v552 = vadd.f32 %v546, %v550
    %v553 = vpack.c.bf16 %v552, %v551
    %v554 = vld [vmem:[%s3] sm:$0xf]
    %v555 = vld [vmem:[%s3 + $0x4] sm:$0xf]
    %v556 = vld [vmem:[%s3 + $0x8] sm:$0xf]
    %v557 = vld [vmem:[%s3 + $0xc] sm:$0xf]
    %v558 = vlaneseq
    %v559 = vshrl.u32 %v558, 7
    %v560 = vsub.s32 6, %v559
    %v561 = vrot.slane %v33, %v560
    %v566 = vunpack.c.l.b16 %v554
    %v567 = vunpack.c.l.b16 %v555
    %v568 = vunpack.c.l.b16 %v556
    %v569 = vunpack.c.l.b16 %v557
    %v570 = vpack.c.b16 %v567, %v566
    %v571 = vpack.c.b16 %v569, %v568
    %v575 = vsel %vm50, %v553, 0
    %577 = vmatprep.subr.bf16.mxu0 0
    %578 = vmatpush1.bf16.msra.mxu0 %v570
    %579 = vmatprep.subr.bf16.mxu0 0
    %580 = vmatpush1.bf16.msra.mxu0 %v571
    %581 = vmatprep.subr.bf16.mxu0 0
    %582 = vmatpush1.bf16.msra.mxu0 0
    %583 = vmatprep.subr.bf16.mxu0 0
    %584 = vmatpush1.bf16.msra.mxu0 0
    %585 = vmatprep.subr.bf16.mxu0 0
    %586 = vmatpush1.bf16.msra.mxu0 0
    %587 = vmatprep.subr.bf16.mxu0 0
    %588 = vmatpush1.bf16.msra.mxu0 0
    %589 = vmatprep.subr.bf16.mxu0 0
    %590 = vmatpush1.bf16.msra.mxu0 0
    %591 = vmatprep.subr.bf16.mxu0 0
    %592 = vmatpush1.bf16.msra.mxu0 0
    %593 = vmatprep.subr.bf16.mxu0 0
    %594 = vmatpush1.bf16.msra.mxu0 0
    %595 = vmatprep.subr.bf16.mxu0 0
    %596 = vmatpush1.bf16.msra.mxu0 0
    %597 = vmatprep.subr.bf16.mxu0 0
    %598 = vmatpush1.bf16.msra.mxu0 0
    %599 = vmatprep.subr.bf16.mxu0 0
    %600 = vmatpush1.bf16.msra.mxu0 0
    %601 = vmatprep.subr.bf16.mxu0 0
    %602 = vmatpush1.bf16.msra.mxu0 0
    %603 = vmatprep.subr.bf16.mxu0 0
    %604 = vmatpush1.bf16.msra.mxu0 0
    %605 = vmatprep.subr.bf16.mxu0 0
    %606 = vmatpush1.bf16.msra.mxu0 0
    %607 = vmatprep.subr.bf16.mxu0 0
    %608 = vmatpush1.bf16.msra.mxu0 0
    %609 = vmatprep.mubr.bf16.mxu0 0
    %610 = vmatmul.mubr.bf16.gmra.mrb[0].mxu0 %v575
    %v611 = vpop.f32.mrb[0].mxu0
    %v612 = vadd.f32 %v561, %v611
    %v613 = vpop.f32.mrb[0].mxu0
    %v614 = vpop.f32.mrb[0].mxu0
    %v615 = vadd.f32 %v561, %v614
    %v616 = vpop.f32.mrb[0].mxu0
    %617 = vdwg.mxu0
    %v618 = vmul.f32 %v612, 0.5
    %v619 = vmul.f32 %v615, 0.5
    %v620 = vmul.f32 %v612, %v612
    %v621 = vmul.f32 %v615, %v615
    %v622 = vmul.f32 %v612, %v620
    %v623 = vmul.f32 %v615, %v621
    %v624 = vmul.f32 %v622, 0.044715
    %v625 = vmul.f32 %v623, 0.044715
    %v626 = vadd.f32 %v612, %v624
    %v627 = vadd.f32 %v615, %v625
    %v628 = vmul.f32 %v626, 0.7978845
    %v629 = vmul.f32 %v627, 0.7978845
    %v630 = vtanh.pop %v628
    %v631 = vtanh.pop %v629
    %v632 = vadd.f32 %v630, 1.0
    %v633 = vadd.f32 %v631, 1.0
    %v634 = vmul.f32 %v618, %v632
    %v635 = vmul.f32 %v619, %v633
    %v636 = vpack.c.bf16 %v635, %v634
    %v637 = vld [vmem:[%s4] sm:$0xf]
    %v638 = vld [vmem:[%s4 + $0x4] sm:$0xf]
    %v639 = vld [vmem:[%s4 + $0x8] sm:$0xf]
    %v640 = vld [vmem:[%s4 + $0xc] sm:$0xf]
    %v641 = vld [vmem:[%s4 + $0x10] sm:$0xf]
    %v642 = vld [vmem:[%s4 + $0x14] sm:$0xf]
    %v643 = vld [vmem:[%s4 + $0x18] sm:$0xf]
    %v644 = vld [vmem:[%s4 + $0x1c] sm:$0xf]
    %v645 = vld [vmem:[%s4 + $0x20] sm:$0xf]
    %v646 = vld [vmem:[%s4 + $0x24] sm:$0xf]
    %v647 = vld [vmem:[%s4 + $0x28] sm:$0xf]
    %v648 = vld [vmem:[%s4 + $0x2c] sm:$0xf]
    %v649 = vld [vmem:[%s4 + $0x30] sm:$0xf]
    %v650 = vld [vmem:[%s4 + $0x34] sm:$0xf]
    %v651 = vld [vmem:[%s4 + $0x38] sm:$0xf]
    %v652 = vld [vmem:[%s4 + $0x3c] sm:$0xf]
    %v669 = vunpack.c.l.b16 %v637
    %v670 = vunpack.c.l.b16 %v638
    %v671 = vunpack.c.l.b16 %v639
    %v672 = vunpack.c.l.b16 %v640
    %v673 = vunpack.c.l.b16 %v641
    %v674 = vunpack.c.l.b16 %v642
    %v675 = vunpack.c.l.b16 %v643
    %v676 = vunpack.c.l.b16 %v644
    %v677 = vunpack.c.l.b16 %v645
    %v678 = vunpack.c.l.b16 %v646
    %v679 = vunpack.c.l.b16 %v647
    %v680 = vunpack.c.l.b16 %v648
    %v681 = vunpack.c.l.b16 %v649
    %v682 = vunpack.c.l.b16 %v650
    %v683 = vunpack.c.l.b16 %v651
    %v684 = vunpack.c.l.b16 %v652
    %v685 = vpack.c.b16 %v670, %v669
    %v686 = vpack.c.b16 %v672, %v671
    %v687 = vpack.c.b16 %v674, %v673
    %v688 = vpack.c.b16 %v676, %v675
    %v689 = vpack.c.b16 %v678, %v677
    %v690 = vpack.c.b16 %v680, %v679
    %v691 = vpack.c.b16 %v682, %v681
    %v692 = vpack.c.b16 %v684, %v683
    %701 = vmatprep.subr.bf16.mxu0 0
    %702 = vmatpush1.bf16.msra.mxu0 %v685
    %703 = vmatprep.subr.bf16.mxu0 0
    %704 = vmatpush1.bf16.msra.mxu0 %v686
    %705 = vmatprep.subr.bf16.mxu0 0
    %706 = vmatpush1.bf16.msra.mxu0 %v687
    %707 = vmatprep.subr.bf16.mxu0 0
    %708 = vmatpush1.bf16.msra.mxu0 %v688
    %709 = vmatprep.subr.bf16.mxu0 0
    %710 = vmatpush1.bf16.msra.mxu0 %v689
    %711 = vmatprep.subr.bf16.mxu0 0
    %712 = vmatpush1.bf16.msra.mxu0 %v690
    %713 = vmatprep.subr.bf16.mxu0 0
    %714 = vmatpush1.bf16.msra.mxu0 %v691
    %715 = vmatprep.subr.bf16.mxu0 0
    %716 = vmatpush1.bf16.msra.mxu0 %v692
    %717 = vmatprep.subr.bf16.mxu0 0
    %718 = vmatpush1.bf16.msra.mxu0 0
    %719 = vmatprep.subr.bf16.mxu0 0
    %720 = vmatpush1.bf16.msra.mxu0 0
    %721 = vmatprep.subr.bf16.mxu0 0
    %722 = vmatpush1.bf16.msra.mxu0 0
    %723 = vmatprep.subr.bf16.mxu0 0
    %724 = vmatpush1.bf16.msra.mxu0 0
    %725 = vmatprep.subr.bf16.mxu0 0
    %726 = vmatpush1.bf16.msra.mxu0 0
    %727 = vmatprep.subr.bf16.mxu0 0
    %728 = vmatpush1.bf16.msra.mxu0 0
    %729 = vmatprep.subr.bf16.mxu0 0
    %730 = vmatpush1.bf16.msra.mxu0 0
    %731 = vmatprep.subr.bf16.mxu0 0
    %732 = vmatpush1.bf16.msra.mxu0 0
    %733 = vmatprep.mubr.bf16.mxu0 0
    %734 = vmatmul.mubr.bf16.gmra.mrb[0].mxu0 %v636
    %v735 = vpop.f32.mrb[0].mxu0
    %v736 = vadd.f32 0.0, %v735
    %v737 = vpop.f32.mrb[0].mxu0
    %v738 = vpop.f32.mrb[0].mxu0
    %v739 = vadd.f32 0.0, %v738
    %v740 = vpop.f32.mrb[0].mxu0
    %741 = vdwg.mxu0
    %v742 = vadd.f32 %v509, %v736
    %v743 = vadd.f32 %v510, %v739
    %v744 = vlaneseq
    %v745 = vshrl.u32 %v744, 7
    %v746 = vsub.s32 5, %v745
    %v747 = vrot.slane %v33, %v746
    %v748 = vadd.f32 %v742, %v747
    %v749 = vadd.f32 %v743, %v747
    %750 = vst.msk [vmem:[#allocation2] sm:$0xff] %vm50, %v748
    %751 = vst.msk [vmem:[#allocation2 + $0x8] sm:$0xff] %vm50, %v749
    // Predicated region
    $region34: #{_block_apply.1} parent=1 // pred_check
      _
    $region35: #{_block_apply.1} parent=1 // pred_check_branch
      %753 = sbr.rel (0) target = $region37
    $region36: #{_block_apply.1} parent=1 // pred_region
      %s755 = ssub.s32 256, 256
      %756 = vsyncadd [#allocation3], %s755
      %s757 = sshll.u32 [#allocation2], 4
      %s758 = int_to_ptr.vmem [resolvable:$true] %s757
      %763 = dma.vmem_to_hbm [thread:$0]  %s758, 256, %s8, [#allocation3], 128, 128, 8
    $region37: #{_block_apply.1} parent=1 // pred_fallthru
      _
    // Predicated region
    $region38: #{_block_apply.1} parent=1 // pred_check
      _
    $region39: #{_block_apply.1} parent=1 // pred_check_branch
      %765 = sbr.rel (0) target = $region41
    $region40: #{_block_apply.1} parent=1 // pred_region
      %766 = dma.done [#allocation3], 256
    $region41: #{_block_apply.1} parent=1 // pred_fallthru
      _
    %767 = vsyncpa [#allocation3], 1

</llo_original>
